<compile_context>
chip_gen: v7x
topology: tpu7x:2x2x1
jax: 0.10.0
libtpu: 0.0.40
codegen_flags: <defaults>
</compile_context>

<pallas_src>
import functools

import jax
import jax.numpy as jnp
from jax.experimental import pallas as pl
from jax.experimental.pallas import tpu as pltpu

LANE = 128
SUBLANE = 8
_MIB = 1024 * 1024
_MIN_SPLIT_ROWS = 2048  # per-core minimum before splitting a single-step grid


def _round_up(v, m):
    return ((v + m - 1) // m) * m


@functools.lru_cache(maxsize=1)
def _vmem_capacity_bytes():
    """Physical VMEM capacity of the current chip (trace-time query)."""
    try:
        return int(pltpu.get_tpu_info().vmem_capacity_bytes)
    except Exception:
        return 64 * _MIB  # conservative fallback (v7x physical size)


@functools.lru_cache(maxsize=1)
def _tensorcores_per_chip():
    """2 on multi-TensorCore chips (v4 megacore / v7x), else 1."""
    try:
        kind = jax.devices()[0].device_kind.lower()
    except Exception:
        return 1
    return 2 if ("v7" in kind or "v4" in kind) else 1


def _policy_kernel(x_ref,
                   w1_ref, b1_ref,
                   w2_ref, b2_ref,
                   w3_ref, b3_ref,
                   w4_ref, b4_ref,
                   w5_ref, b5_ref,
                   o_ref):
    """Fused forward pass: 4x (Linear + ReLU) then Linear + tanh.

    x arrives f32 and is cast to the weight dtype (bf16) on the VPU in-kernel.
    All dots accumulate in f32 on the MXU; biases are f32. The last matmul is
    lane-dense (N = padded-to-128); only the valid out_dim columns are stored.
    """
    wdt = w1_ref.dtype
    od = o_ref.shape[-1]

    x = x_ref[...].astype(wdt)  # in-kernel cast: no extra HBM pass over x

    h = jnp.dot(x, w1_ref[...], preferred_element_type=jnp.float32) + b1_ref[...]
    h = jnp.maximum(h, 0.0).astype(wdt)

    h = jnp.dot(h, w2_ref[...], preferred_element_type=jnp.float32) + b2_ref[...]
    h = jnp.maximum(h, 0.0).astype(wdt)

    h = jnp.dot(h, w3_ref[...], preferred_element_type=jnp.float32) + b3_ref[...]
    h = jnp.maximum(h, 0.0).astype(wdt)

    h = jnp.dot(h, w4_ref[...], preferred_element_type=jnp.float32) + b4_ref[...]
    h = jnp.maximum(h, 0.0).astype(wdt)

    # Lane-dense compute in VMEM (w5 is zero-padded to a multiple of 128 cols),
    # then slice to the real output width before bias/tanh/store.
    h = jnp.dot(h, w5_ref[...], preferred_element_type=jnp.float32)
    o_ref[...] = jnp.tanh(h[:, :od] + b5_ref[...]).astype(o_ref.dtype)


def prepare_params(params, compute_dtype=jnp.bfloat16):
    """One-time parameter preprocessing (do this OUTSIDE the hot path).

    Weights -> compute_dtype (bf16 default); biases stay f32 as [1, out].
    w5 is zero-padded to a multiple of 128 output columns so the final matmul
    is lane-dense; b5 stays unpadded (its width defines the true out_dim)."""
    cd = compute_dtype
    out_dim = params["w5"].shape[1]
    out_pad = _round_up(max(out_dim, LANE), LANE)

    prep = {}
    for l in range(1, 5):
        prep[f"w{l}"] = params[f"w{l}"].astype(cd)
        prep[f"b{l}"] = params[f"b{l}"].reshape(1, -1).astype(jnp.float32)
    w5 = params["w5"].astype(cd)
    prep["w5"] = jnp.zeros((w5.shape[0], out_pad), cd).at[:, :out_dim].set(w5)
    prep["b5"] = params["b5"].reshape(1, -1).astype(jnp.float32)
    return prep


@functools.partial(jax.jit, static_argnames=("block_b", "out_dtype"))
def continuous_policy_forward(x, prepared_params, block_b=4096,
                              out_dtype=jnp.bfloat16):
    """x: [..., input_dim] float32. prepared_params: output of prepare_params().

    block_b: batch-tile size (rows); sweep 2048-8192 for large batches.
    out_dtype: output dtype (bf16 default to halve the dominant HBM stream)."""
    p = prepared_params
    in_dim = p["w1"].shape[0]
    out_dim = p["b5"].shape[1]          # true output width
    out_pad = p["w5"].shape[1]          # lane-padded compute width
    osize = jnp.dtype(out_dtype).itemsize

    lead = x.shape[:-1]
    x2 = x.reshape(-1, in_dim)
    B = x2.shape[0]

    # ---- generation-aware VMEM budget & batch-tile cap ------------------------
    vmem_cap = _vmem_capacity_bytes()                   # 64 MiB v7x / 128 MiB v5e,v6e
    vmem_limit = int(min(vmem_cap // 2, 96 * _MIB))
    # Conservative per-row VMEM estimate: double-buffered x/out tiles plus f32
    # accumulators and bf16 activation copies for every layer.
    act_per_row = 4 * (64 + 128 + 128 + 64 + out_pad) + 2 * (64 + 128 + 128 + 64)
    per_row = 2 * in_dim * 4 + 2 * out_dim * osize + act_per_row
    weight_bytes = 2 * sum(int(v.size) * v.dtype.itemsize for v in p.values())
    blk_cap = (int(0.6 * vmem_limit) - weight_bytes) // per_row
    blk_cap = max(SUBLANE, (blk_cap // SUBLANE) * SUBLANE)

    # ---- batch-tile selection (static, at trace time) -------------------------
    blk = min(block_b, B, blk_cap)
    if blk < B:
        blk = max(SUBLANE, (blk // SUBLANE) * SUBLANE)
    elif _tensorcores_per_chip() > 1 and B >= 2 * _MIN_SPLIT_ROWS:
        # Single-step grid would leave one TensorCore idle on 2-TC chips; split
        # in half only when each half amortizes the per-step overhead.
        blk = max(SUBLANE, ((B + 1) // 2 // SUBLANE) * SUBLANE)
    n_steps = pl.cdiv(B, blk)

    flat_args = [x2,
                 p["w1"], p["b1"], p["w2"], p["b2"], p["w3"], p["b3"],
                 p["w4"], p["b4"], p["w5"], p["b5"]]

    # Weights/biases are small and grid-invariant (constant index_map -> DMA'd
    # once); only the batch axis of x / out is tiled.
    in_specs = [pl.BlockSpec((blk, in_dim), lambda i: (i, 0))]
    for a in flat_args[1:]:
        in_specs.append(pl.BlockSpec(a.shape, lambda i: (0, 0)))
    out_spec = pl.BlockSpec((blk, out_dim), lambda i: (i, 0))

    # ---- advisory cost estimate ----------------------------------------------
    flops = 2 * B * (in_dim * 64 + 64 * 128 + 128 * 128 + 128 * 64 + 64 * out_pad)
    bytes_accessed = int(
        x2.size * x2.dtype.itemsize
        + sum(int(a.size) * a.dtype.itemsize for a in flat_args[1:])
        + B * out_dim * osize)
    cost = pl.CostEstimate(flops=flops,
                           transcendentals=B * out_dim,
                           bytes_accessed=bytes_accessed)

    out = pl.pallas_call(
        _policy_kernel,
        out_shape=jax.ShapeDtypeStruct((B, out_dim), out_dtype),
        grid_spec=pltpu.PrefetchScalarGridSpec(
            num_scalar_prefetch=0,
            grid=(n_steps,),
            in_specs=in_specs,
            out_specs=out_spec,
        ),
        compiler_params=pltpu.CompilerParams(
            dimension_semantics=("parallel",),
            vmem_limit_bytes=vmem_limit,
        ),
        cost_estimate=cost,
    )(*flat_args)

    return out.reshape(*lead, out_dim)


def init_params(key, input_dim, output_dim):
    """Deterministic init mimicking torch.nn.Linear (uniform +-1/sqrt(fan_in)).

    Weights are stored as [in, out] (transposed from PyTorch's [out, in])."""
    dims = [input_dim, 64, 128, 128, 64, output_dim]
    params = {}
    keys = jax.random.split(key, 2 * (len(dims) - 1))
    for layer in range(len(dims) - 1):
        fan_in, fan_out = dims[layer], dims[layer + 1]
        bound = 1.0 / jnp.sqrt(jnp.float32(fan_in))
        wk, bk = keys[2 * layer], keys[2 * layer + 1]
        params[f"w{layer + 1}"] = jax.random.uniform(
            wk, (fan_in, fan_out), jnp.float32, minval=-bound, maxval=bound)
        params[f"b{layer + 1}"] = jax.random.uniform(
            bk, (1, fan_out), jnp.float32, minval=-bound, maxval=bound)
    return params


def reference_forward(x, params):
    """Pure-JAX f32 reference for correctness checking."""
    h = jnp.maximum(x @ params["w1"] + params["b1"], 0.0)
    h = jnp.maximum(h @ params["w2"] + params["b2"], 0.0)
    h = jnp.maximum(h @ params["w3"] + params["b3"], 0.0)
    h = jnp.maximum(h @ params["w4"] + params["b4"], 0.0)
    return jnp.tanh(h @ params["w5"] + params["b5"])


if __name__ == "__main__":
    key = jax.random.PRNGKey(0)
    k_param, k_x = jax.random.split(key)

    input_dim = 16
    output_dim = 4
    batch = 8

    params = init_params(k_param, input_dim, output_dim)
    prepared = prepare_params(params)          # one-time, outside the hot path
    x = jax.random.normal(k_x, (batch, input_dim), jnp.float32)

    out = continuous_policy_forward(x, prepared)
    out = jax.block_until_ready(out)

    ref = reference_forward(x, params)
    assert out.shape == (batch, output_dim)
    # bf16 operands/output with f32 MXU accumulation: relaxed tolerance vs the
    # pure-f32 reference.
    assert jnp.allclose(out.astype(jnp.float32), ref, atol=2e-2, rtol=2e-2), \
        "mismatch vs reference"

    print("KERNEL_OK")
</pallas_src>

<mosaic_0001>
module attributes {stable_mosaic.version = 11 : i64} {
  func.func @_policy_kernel(%arg0: i32, %arg1: memref<8x16xf32, #tpu.memory_space<vmem>>, %arg2: memref<16x64xbf16, #tpu.memory_space<vmem>>, %arg3: memref<1x64xf32, #tpu.memory_space<vmem>>, %arg4: memref<64x128xbf16, #tpu.memory_space<vmem>>, %arg5: memref<1x128xf32, #tpu.memory_space<vmem>>, %arg6: memref<128x128xbf16, #tpu.memory_space<vmem>>, %arg7: memref<1x128xf32, #tpu.memory_space<vmem>>, %arg8: memref<128x64xbf16, #tpu.memory_space<vmem>>, %arg9: memref<1x64xf32, #tpu.memory_space<vmem>>, %arg10: memref<64x128xbf16, #tpu.memory_space<vmem>>, %arg11: memref<1x4xf32, #tpu.memory_space<vmem>>, %arg12: memref<8x4xbf16, #tpu.memory_space<vmem>>) attributes {dimension_semantics = [#tpu.dimension_semantics<parallel>], iteration_bounds = array<i64: 1>, scalar_prefetch = 0 : i64, scratch_operands = 0 : i64, tpu.core_type = #tpu.core_type<tc>, window_params = [{transform_indices = @transform_0, window_bounds = array<i64: 8, 16>}, {pipeline_mode = #tpu.pipeline_mode<synchronous>, transform_indices = @transform_1, window_bounds = array<i64: 16, 64>}, {pipeline_mode = #tpu.pipeline_mode<synchronous>, transform_indices = @transform_2, window_bounds = array<i64: 1, 64>}, {pipeline_mode = #tpu.pipeline_mode<synchronous>, transform_indices = @transform_3, window_bounds = array<i64: 64, 128>}, {pipeline_mode = #tpu.pipeline_mode<synchronous>, transform_indices = @transform_4, window_bounds = array<i64: 1, 128>}, {pipeline_mode = #tpu.pipeline_mode<synchronous>, transform_indices = @transform_5, window_bounds = array<i64: 128, 128>}, {pipeline_mode = #tpu.pipeline_mode<synchronous>, transform_indices = @transform_6, window_bounds = array<i64: 1, 128>}, {pipeline_mode = #tpu.pipeline_mode<synchronous>, transform_indices = @transform_7, window_bounds = array<i64: 128, 64>}, {pipeline_mode = #tpu.pipeline_mode<synchronous>, transform_indices = @transform_8, window_bounds = array<i64: 1, 64>}, {pipeline_mode = #tpu.pipeline_mode<synchronous>, transform_indices = @transform_9, window_bounds = array<i64: 64, 128>}, {pipeline_mode = #tpu.pipeline_mode<synchronous>, transform_indices = @transform_10, window_bounds = array<i64: 1, 4>}, {transform_indices = @transform_11, window_bounds = array<i64: 8, 4>}]} {
    %c0 = arith.constant 0 : index
    %c0_0 = arith.constant 0 : index
    %0 = vector.load %arg1[%c0, %c0_0] : memref<8x16xf32, #tpu.memory_space<vmem>>, vector<8x16xf32>
    %1 = arith.truncf %0 : vector<8x16xf32> to vector<8x16xbf16>
    %c0_1 = arith.constant 0 : index
    %c0_2 = arith.constant 0 : index
    %2 = vector.load %arg2[%c0_1, %c0_2] : memref<16x64xbf16, #tpu.memory_space<vmem>>, vector<16x64xbf16>
    %cst = arith.constant dense<0.000000e+00> : vector<8x64xf32>
    %3 = tpu.matmul %1, %2, %cst {dimension_numbers = #tpu.dot_dimension_numbers<[1], [0], [0], [1], [0, 0, 1, 1], [], []>} : vector<8x16xbf16>, vector<16x64xbf16>, vector<8x64xf32> -> vector<8x64xf32>
    %c0_3 = arith.constant 0 : index
    %c0_4 = arith.constant 0 : index
    %4 = vector.load %arg3[%c0_3, %c0_4] : memref<1x64xf32, #tpu.memory_space<vmem>>, vector<1x64xf32>
    %5 = vector.broadcast %4 : vector<1x64xf32> to vector<8x64xf32>
    %6 = arith.addf %3, %5 : vector<8x64xf32>
    %cst_5 = arith.constant 0.000000e+00 : f32
    %7 = vector.broadcast %cst_5 : f32 to vector<8x64xf32>
    %8 = arith.maximumf %6, %7 : vector<8x64xf32>
    %9 = arith.truncf %8 : vector<8x64xf32> to vector<8x64xbf16>
    %c0_6 = arith.constant 0 : index
    %c0_7 = arith.constant 0 : index
    %10 = vector.load %arg4[%c0_6, %c0_7] : memref<64x128xbf16, #tpu.memory_space<vmem>>, vector<64x128xbf16>
    %cst_8 = arith.constant dense<0.000000e+00> : vector<8x128xf32>
    %11 = tpu.matmul %9, %10, %cst_8 {dimension_numbers = #tpu.dot_dimension_numbers<[1], [0], [0], [1], [0, 0, 1, 1], [], []>} : vector<8x64xbf16>, vector<64x128xbf16>, vector<8x128xf32> -> vector<8x128xf32>
    %c0_9 = arith.constant 0 : index
    %c0_10 = arith.constant 0 : index
    %12 = vector.load %arg5[%c0_9, %c0_10] : memref<1x128xf32, #tpu.memory_space<vmem>>, vector<1x128xf32>
    %13 = vector.broadcast %12 : vector<1x128xf32> to vector<8x128xf32>
    %14 = arith.addf %11, %13 : vector<8x128xf32>
    %cst_11 = arith.constant 0.000000e+00 : f32
    %15 = vector.broadcast %cst_11 : f32 to vector<8x128xf32>
    %16 = arith.maximumf %14, %15 : vector<8x128xf32>
    %17 = arith.truncf %16 : vector<8x128xf32> to vector<8x128xbf16>
    %c0_12 = arith.constant 0 : index
    %c0_13 = arith.constant 0 : index
    %18 = vector.load %arg6[%c0_12, %c0_13] : memref<128x128xbf16, #tpu.memory_space<vmem>>, vector<128x128xbf16>
    %cst_14 = arith.constant dense<0.000000e+00> : vector<8x128xf32>
    %19 = tpu.matmul %17, %18, %cst_14 {dimension_numbers = #tpu.dot_dimension_numbers<[1], [0], [0], [1], [0, 0, 1, 1], [], []>} : vector<8x128xbf16>, vector<128x128xbf16>, vector<8x128xf32> -> vector<8x128xf32>
    %c0_15 = arith.constant 0 : index
    %c0_16 = arith.constant 0 : index
    %20 = vector.load %arg7[%c0_15, %c0_16] : memref<1x128xf32, #tpu.memory_space<vmem>>, vector<1x128xf32>
    %21 = vector.broadcast %20 : vector<1x128xf32> to vector<8x128xf32>
    %22 = arith.addf %19, %21 : vector<8x128xf32>
    %cst_17 = arith.constant 0.000000e+00 : f32
    %23 = vector.broadcast %cst_17 : f32 to vector<8x128xf32>
    %24 = arith.maximumf %22, %23 : vector<8x128xf32>
    %25 = arith.truncf %24 : vector<8x128xf32> to vector<8x128xbf16>
    %c0_18 = arith.constant 0 : index
    %c0_19 = arith.constant 0 : index
    %26 = vector.load %arg8[%c0_18, %c0_19] : memref<128x64xbf16, #tpu.memory_space<vmem>>, vector<128x64xbf16>
    %cst_20 = arith.constant dense<0.000000e+00> : vector<8x64xf32>
    %27 = tpu.matmul %25, %26, %cst_20 {dimension_numbers = #tpu.dot_dimension_numbers<[1], [0], [0], [1], [0, 0, 1, 1], [], []>} : vector<8x128xbf16>, vector<128x64xbf16>, vector<8x64xf32> -> vector<8x64xf32>
    %c0_21 = arith.constant 0 : index
    %c0_22 = arith.constant 0 : index
    %28 = vector.load %arg9[%c0_21, %c0_22] : memref<1x64xf32, #tpu.memory_space<vmem>>, vector<1x64xf32>
    %29 = vector.broadcast %28 : vector<1x64xf32> to vector<8x64xf32>
    %30 = arith.addf %27, %29 : vector<8x64xf32>
    %cst_23 = arith.constant 0.000000e+00 : f32
    %31 = vector.broadcast %cst_23 : f32 to vector<8x64xf32>
    %32 = arith.maximumf %30, %31 : vector<8x64xf32>
    %33 = arith.truncf %32 : vector<8x64xf32> to vector<8x64xbf16>
    %c0_24 = arith.constant 0 : index
    %c0_25 = arith.constant 0 : index
    %34 = vector.load %arg10[%c0_24, %c0_25] : memref<64x128xbf16, #tpu.memory_space<vmem>>, vector<64x128xbf16>
    %cst_26 = arith.constant dense<0.000000e+00> : vector<8x128xf32>
    %35 = tpu.matmul %33, %34, %cst_26 {dimension_numbers = #tpu.dot_dimension_numbers<[1], [0], [0], [1], [0, 0, 1, 1], [], []>} : vector<8x64xbf16>, vector<64x128xbf16>, vector<8x128xf32> -> vector<8x128xf32>
    %36 = vector.extract_strided_slice %35 {offsets = [0, 0], sizes = [8, 4], strides = [1, 1]} : vector<8x128xf32> to vector<8x4xf32>
    %c0_27 = arith.constant 0 : index
    %c0_28 = arith.constant 0 : index
    %37 = vector.load %arg11[%c0_27, %c0_28] : memref<1x4xf32, #tpu.memory_space<vmem>>, vector<1x4xf32>
    %38 = vector.broadcast %37 : vector<1x4xf32> to vector<8x4xf32>
    %39 = arith.addf %36, %38 : vector<8x4xf32>
    %40 = math.tanh %39 : vector<8x4xf32>
    %41 = arith.truncf %40 : vector<8x4xf32> to vector<8x4xbf16>
    %c0_29 = arith.constant 0 : index
    %c0_30 = arith.constant 0 : index
    %42 = vector.load %arg12[%c0_29, %c0_30] : memref<8x4xbf16, #tpu.memory_space<vmem>>, vector<8x4xbf16>
    tpu.vector_store %arg12[%c0_29, %c0_30], %41 {strides = array<i32>} : memref<8x4xbf16, #tpu.memory_space<vmem>>, vector<8x4xbf16>,
    return
  }
  func.func @transform_0(%arg0: i32) -> (i32, i32) {
    %c0_i32 = arith.constant 0 : i32
    %c0_i32_0 = arith.constant 0 : i32
    return %arg0, %c0_i32 : i32, i32
  }
  func.func @transform_1(%arg0: i32) -> (i32, i32) {
    %c0_i32 = arith.constant 0 : i32
    %c0_i32_0 = arith.constant 0 : i32
    %c0_i32_1 = arith.constant 0 : i32
    return %c0_i32, %c0_i32_0 : i32, i32
  }
  func.func @transform_2(%arg0: i32) -> (i32, i32) {
    %c0_i32 = arith.constant 0 : i32
    %c0_i32_0 = arith.constant 0 : i32
    %c0_i32_1 = arith.constant 0 : i32
    return %c0_i32, %c0_i32_0 : i32, i32
  }
  func.func @transform_3(%arg0: i32) -> (i32, i32) {
    %c0_i32 = arith.constant 0 : i32
    %c0_i32_0 = arith.constant 0 : i32
    %c0_i32_1 = arith.constant 0 : i32
    return %c0_i32, %c0_i32_0 : i32, i32
  }
  func.func @transform_4(%arg0: i32) -> (i32, i32) {
    %c0_i32 = arith.constant 0 : i32
    %c0_i32_0 = arith.constant 0 : i32
    %c0_i32_1 = arith.constant 0 : i32
    return %c0_i32, %c0_i32_0 : i32, i32
  }
  func.func @transform_5(%arg0: i32) -> (i32, i32) {
    %c0_i32 = arith.constant 0 : i32
    %c0_i32_0 = arith.constant 0 : i32
    %c0_i32_1 = arith.constant 0 : i32
    return %c0_i32, %c0_i32_0 : i32, i32
  }
  func.func @transform_6(%arg0: i32) -> (i32, i32) {
    %c0_i32 = arith.constant 0 : i32
    %c0_i32_0 = arith.constant 0 : i32
    %c0_i32_1 = arith.constant 0 : i32
    return %c0_i32, %c0_i32_0 : i32, i32
  }
  func.func @transform_7(%arg0: i32) -> (i32, i32) {
    %c0_i32 = arith.constant 0 : i32
    %c0_i32_0 = arith.constant 0 : i32
    %c0_i32_1 = arith.constant 0 : i32
    return %c0_i32, %c0_i32_0 : i32, i32
  }
  func.func @transform_8(%arg0: i32) -> (i32, i32) {
    %c0_i32 = arith.constant 0 : i32
    %c0_i32_0 = arith.constant 0 : i32
    %c0_i32_1 = arith.constant 0 : i32
    return %c0_i32, %c0_i32_0 : i32, i32
  }
  func.func @transform_9(%arg0: i32) -> (i32, i32) {
    %c0_i32 = arith.constant 0 : i32
    %c0_i32_0 = arith.constant 0 : i32
    %c0_i32_1 = arith.constant 0 : i32
    return %c0_i32, %c0_i32_0 : i32, i32
  }
  func.func @transform_10(%arg0: i32) -> (i32, i32) {
    %c0_i32 = arith.constant 0 : i32
    %c0_i32_0 = arith.constant 0 : i32
    %c0_i32_1 = arith.constant 0 : i32
    return %c0_i32, %c0_i32_0 : i32, i32
  }
  func.func @transform_11(%arg0: i32) -> (i32, i32) {
    %c0_i32 = arith.constant 0 : i32
    %c0_i32_0 = arith.constant 0 : i32
    return %arg0, %c0_i32 : i32, i32
  }
}

</mosaic_0001>

<llo_original>
// kernel: continuous_policy_forward.1
$region0: #{continuous_policy_forward.1}
  #allocation0 [shape = 'u32[]', space=smem, size = 0x4, offset = 0x4, fixed_abs, tag = 'smem constant byte address 0x4 - core index']
  #allocation1 [shape = 'u32[144,128]{1,0:T(1,128)}', space=vmem, size = 0x12000, scoped, tag = 'internal scratch']
  %s0 = inlined_call_operand.hbm [shape: f32[8,16], index: 0, kind: input, shape index: {}]
  %s1 = inlined_call_operand.hbm [shape: bf16[16,64], index: 1, kind: input, shape index: {}]
  %s2 = inlined_call_operand.vmem [shape: f32[1,64], index: 2, kind: input, shape index: {}]
  %s3 = inlined_call_operand.vmem [shape: bf16[64,128], index: 3, kind: input, shape index: {}]
  %s4 = inlined_call_operand.vmem [shape: f32[1,128], index: 4, kind: input, shape index: {}]
  %s5 = inlined_call_operand.vmem [shape: bf16[128,128], index: 5, kind: input, shape index: {}]
  %s6 = inlined_call_operand.hbm [shape: f32[1,128], index: 6, kind: input, shape index: {}]
  %s7 = inlined_call_operand.vmem [shape: bf16[128,64], index: 7, kind: input, shape index: {}]
  %s8 = inlined_call_operand.hbm [shape: f32[1,64], index: 8, kind: input, shape index: {}]
  %s9 = inlined_call_operand.hbm [shape: bf16[64,128], index: 9, kind: input, shape index: {}]
  %s10 = inlined_call_operand.hbm [shape: f32[1,4], index: 10, kind: input, shape index: {}]
  %s11 = inlined_call_operand.vmem [shape: bf16[8,4], index: 11, kind: output, shape index: {}]
  %s12 = sld [smem:[#allocation0]]
  $region78: #{continuous_policy_forward.1} parent=0
    _
  %s14 = ssub.s32 1, %s12
  %s15 = scalar_select 0, %s14, %s12
  $region1: #{continuous_policy_forward.1} parent=0
    #allocation2 [shape = 'u8[4096]{0}', space=vmem, size = 0x1000, scoped, tag = 'input window, operand 0, single buffered']
    #allocation3 [shape = 's32[1]{0}', space=sflag, size = 0x4, scoped, tag = 'scoped memory for continuous_policy_forward.1']
    #allocation4 [shape = 'u8[4096]{0}', space=vmem, size = 0x1000, scoped, tag = 'input window, operand 1, single buffered']
    #allocation5 [shape = 's32[1]{0}', space=sflag, size = 0x4, scoped, tag = 'scoped memory for continuous_policy_forward.1']
    #allocation6 [shape = 'u8[512]{0}', space=vmem, size = 0x400, scoped, tag = 'input window, operand 6, single buffered']
    #allocation7 [shape = 'u8[512]{0}', space=vmem, size = 0x400, scoped, tag = 'input window, operand 8, single buffered']
    #allocation8 [shape = 's32[1]{0}', space=sflag, size = 0x4, scoped, tag = 'scoped memory for continuous_policy_forward.1']
    #allocation9 [shape = 'u8[16384]{0}', space=vmem, size = 0x4000, scoped, tag = 'input window, operand 9, single buffered']
    #allocation10 [shape = 'u8[512]{0}', space=vmem, size = 0x400, scoped, tag = 'input window, operand 10, single buffered']
    #allocation11 [shape = 's32[1]{0}', space=sflag, size = 0x4, scoped, tag = 'scoped memory for continuous_policy_forward.1']
    %16 = vsyncpa [#allocation3], 0
    %17 = vsyncpa [#allocation5], 0
    %18 = vsyncpa [#allocation8], 0
    %19 = vsyncpa [#allocation11], 0
    // Predicated region
    $region2: #{continuous_policy_forward.1} parent=1 // pred_check
      _
    $region3: #{continuous_policy_forward.1} parent=1 // pred_check_branch
      %21 = sbr.rel (0) target = $region5
    $region4: #{continuous_policy_forward.1} parent=1 // pred_region
      %s23 = ssub.s32 128, 128
      %24 = vsyncadd [#allocation3], %s23
      %s26 = sshll.u32 [#allocation2], 4
      %s27 = int_to_ptr.vmem [resolvable:$true] %s26
      %29 = dma.hbm_to_vmem [thread:$0]  %s0, 128, %s27, [#allocation3]
    $region5: #{continuous_policy_forward.1} parent=1 // pred_fallthru
      _
    // Predicated region
    $region6: #{continuous_policy_forward.1} parent=1 // pred_check
      _
    $region7: #{continuous_policy_forward.1} parent=1 // pred_check_branch
      %31 = sbr.rel (0) target = $region9
    $region8: #{continuous_policy_forward.1} parent=1 // pred_region
      %s33 = ssub.s32 128, 128
      %34 = vsyncadd [#allocation5], %s33
      %s35 = sshll.u32 [#allocation4], 4
      %s36 = int_to_ptr.vmem [resolvable:$true] %s35
      %41 = dma.hbm_to_vmem [thread:$0]  %s1, 128, %s36, [#allocation5], 64, 64, 4
    $region9: #{continuous_policy_forward.1} parent=1 // pred_fallthru
      _
    // Predicated region
    $region10: #{continuous_policy_forward.1} parent=1 // pred_check
      _
    $region11: #{continuous_policy_forward.1} parent=1 // pred_check_branch
      %43 = sbr.rel (0) target = $region13
    $region12: #{continuous_policy_forward.1} parent=1 // pred_region
      _
    $region13: #{continuous_policy_forward.1} parent=1 // pred_fallthru
      _
    // Predicated region
    $region14: #{continuous_policy_forward.1} parent=1 // pred_check
      _
    $region15: #{continuous_policy_forward.1} parent=1 // pred_check_branch
      %45 = sbr.rel (0) target = $region17
    $region16: #{continuous_policy_forward.1} parent=1 // pred_region
      _
    $region17: #{continuous_policy_forward.1} parent=1 // pred_fallthru
      _
    // Predicated region
    $region18: #{continuous_policy_forward.1} parent=1 // pred_check
      _
    $region19: #{continuous_policy_forward.1} parent=1 // pred_check_branch
      %47 = sbr.rel (0) target = $region21
    $region20: #{continuous_policy_forward.1} parent=1 // pred_region
      _
    $region21: #{continuous_policy_forward.1} parent=1 // pred_fallthru
      _
    // Predicated region
    $region22: #{continuous_policy_forward.1} parent=1 // pred_check
      _
    $region23: #{continuous_policy_forward.1} parent=1 // pred_check_branch
      %49 = sbr.rel (0) target = $region25
    $region24: #{continuous_policy_forward.1} parent=1 // pred_region
      _
    $region25: #{continuous_policy_forward.1} parent=1 // pred_fallthru
      _
    // Predicated region
    $region26: #{continuous_policy_forward.1} parent=1 // pred_check
      _
    $region27: #{continuous_policy_forward.1} parent=1 // pred_check_branch
      %51 = sbr.rel (0) target = $region29
    $region28: #{continuous_policy_forward.1} parent=1 // pred_region
      %s53 = ssub.s32 16, 16
      %54 = vsyncadd [#allocation5], %s53
      %s56 = sshll.u32 [#allocation6], 4
      %s57 = int_to_ptr.vmem [resolvable:$true] %s56
      %59 = dma.hbm_to_vmem [thread:$0]  %s6, 16, %s57, [#allocation5]
    $region29: #{continuous_policy_forward.1} parent=1 // pred_fallthru
      _
    // Predicated region
    $region30: #{continuous_policy_forward.1} parent=1 // pred_check
      _
    $region31: #{continuous_policy_forward.1} parent=1 // pred_check_branch
      %61 = sbr.rel (0) target = $region33
    $region32: #{continuous_policy_forward.1} parent=1 // pred_region
      _
    $region33: #{continuous_policy_forward.1} parent=1 // pred_fallthru
      _
    // Predicated region
    $region34: #{continuous_policy_forward.1} parent=1 // pred_check
      _
    $region35: #{continuous_policy_forward.1} parent=1 // pred_check_branch
      %63 = sbr.rel (0) target = $region37
    $region36: #{continuous_policy_forward.1} parent=1 // pred_region
      %s65 = ssub.s32 16, 16
      %66 = vsyncadd [#allocation8], %s65
      %s68 = sshll.u32 [#allocation7], 4
      %s69 = int_to_ptr.vmem [resolvable:$true] %s68
      %71 = dma.hbm_to_vmem [thread:$0]  %s8, 16, %s69, [#allocation8]
    $region37: #{continuous_policy_forward.1} parent=1 // pred_fallthru
      _
    // Predicated region
    $region38: #{continuous_policy_forward.1} parent=1 // pred_check
      _
    $region39: #{continuous_policy_forward.1} parent=1 // pred_check_branch
      %73 = sbr.rel (0) target = $region41
    $region40: #{continuous_policy_forward.1} parent=1 // pred_region
      %s75 = ssub.s32 512, 512
      %76 = vsyncadd [#allocation8], %s75
      %s77 = sshll.u32 [#allocation9], 4
      %s78 = int_to_ptr.vmem [resolvable:$true] %s77
      %83 = dma.hbm_to_vmem [thread:$0]  %s9, 512, %s78, [#allocation8], 64, 64, 4
    $region41: #{continuous_policy_forward.1} parent=1 // pred_fallthru
      _
    // Predicated region
    $region42: #{continuous_policy_forward.1} parent=1 // pred_check
      _
    $region43: #{continuous_policy_forward.1} parent=1 // pred_check_branch
      %85 = sbr.rel (0) target = $region45
    $region44: #{continuous_policy_forward.1} parent=1 // pred_region
      %s87 = ssub.s32 16, 16
      %88 = vsyncadd [#allocation11], %s87
      %s90 = sshll.u32 [#allocation10], 4
      %s91 = int_to_ptr.vmem [resolvable:$true] %s90
      %93 = dma.hbm_to_vmem [thread:$0]  %s10, 16, %s91, [#allocation11]
    $region45: #{continuous_policy_forward.1} parent=1 // pred_fallthru
      _
    // Predicated region
    $region46: #{continuous_policy_forward.1} parent=1 // pred_check
      _
    $region47: #{continuous_policy_forward.1} parent=1 // pred_check_branch
      %95 = sbr.rel (0) target = $region49
    $region48: #{continuous_policy_forward.1} parent=1 // pred_region
      %96 = dma.done [#allocation3], 128
    $region49: #{continuous_policy_forward.1} parent=1 // pred_fallthru
      _
    // Predicated region
    $region50: #{continuous_policy_forward.1} parent=1 // pred_check
      _
    $region51: #{continuous_policy_forward.1} parent=1 // pred_check_branch
      %98 = sbr.rel (0) target = $region53
    $region52: #{continuous_policy_forward.1} parent=1 // pred_region
      %99 = dma.done [#allocation5], 128
    $region53: #{continuous_policy_forward.1} parent=1 // pred_fallthru
      _
    // Predicated region
    $region54: #{continuous_policy_forward.1} parent=1 // pred_check
      _
    $region55: #{continuous_policy_forward.1} parent=1 // pred_check_branch
      %101 = sbr.rel (0) target = $region57
    $region56: #{continuous_policy_forward.1} parent=1 // pred_region
      %102 = dma.done [#allocation5], 16
    $region57: #{continuous_policy_forward.1} parent=1 // pred_fallthru
      _
    // Predicated region
    $region58: #{continuous_policy_forward.1} parent=1 // pred_check
      _
    $region59: #{continuous_policy_forward.1} parent=1 // pred_check_branch
      %104 = sbr.rel (0) target = $region61
    $region60: #{continuous_policy_forward.1} parent=1 // pred_region
      %105 = dma.done [#allocation8], 16
    $region61: #{continuous_policy_forward.1} parent=1 // pred_fallthru
      _
    // Predicated region
    $region62: #{continuous_policy_forward.1} parent=1 // pred_check
      _
    $region63: #{continuous_policy_forward.1} parent=1 // pred_check_branch
      %107 = sbr.rel (0) target = $region65
    $region64: #{continuous_policy_forward.1} parent=1 // pred_region
      %108 = dma.done [#allocation8], 512
    $region65: #{continuous_policy_forward.1} parent=1 // pred_fallthru
      _
    // Predicated region
    $region66: #{continuous_policy_forward.1} parent=1 // pred_check
      _
    $region67: #{continuous_policy_forward.1} parent=1 // pred_check_branch
      %110 = sbr.rel (0) target = $region69
    $region68: #{continuous_policy_forward.1} parent=1 // pred_region
      %111 = dma.done [#allocation11], 16
    $region69: #{continuous_policy_forward.1} parent=1 // pred_fallthru
      _
    %v113 = vld [vmem:[#allocation2] sm:$0xff]
    %v114 = vpack.c.bf16 %v113, %v113
    %v115 = vld [vmem:[#allocation4] sm:$0xf]
    %v116 = vld [vmem:[#allocation4 + $0x4] sm:$0xf]
    %v117 = vld [vmem:[%s2] sm:$0x1]
    %v119 = vlaneseq
    %v120 = vshrl.u32 %v119, 7
    %v121 = vsub.s32 0, %v120
    %v122 = vrot.slane %v117, %v121
    %v126 = vunpack.c.l.b16 %v115
    %v127 = vunpack.c.l.b16 %v116
    %v128 = vpack.c.b16 %v127, %v126
    %vm130 = vcmask 130048
    %v132 = vsel %vm130, %v114, 0
    %134 = vmatprep.subr.bf16.mxu0 0
    %135 = vmatpush1.bf16.msra.mxu0 %v128
    %136 = vmatprep.subr.bf16.mxu0 0
    %137 = vmatpush1.bf16.msra.mxu0 0
    %138 = vmatprep.subr.bf16.mxu0 0
    %139 = vmatpush1.bf16.msra.mxu0 0
    %140 = vmatprep.subr.bf16.mxu0 0
    %141 = vmatpush1.bf16.msra.mxu0 0
    %142 = vmatprep.subr.bf16.mxu0 0
    %143 = vmatpush1.bf16.msra.mxu0 0
    %144 = vmatprep.subr.bf16.mxu0 0
    %145 = vmatpush1.bf16.msra.mxu0 0
    %146 = vmatprep.subr.bf16.mxu0 0
    %147 = vmatpush1.bf16.msra.mxu0 0
    %148 = vmatprep.subr.bf16.mxu0 0
    %149 = vmatpush1.bf16.msra.mxu0 0
    %150 = vmatprep.subr.bf16.mxu0 0
    %151 = vmatpush1.bf16.msra.mxu0 0
    %152 = vmatprep.subr.bf16.mxu0 0
    %153 = vmatpush1.bf16.msra.mxu0 0
    %154 = vmatprep.subr.bf16.mxu0 0
    %155 = vmatpush1.bf16.msra.mxu0 0
    %156 = vmatprep.subr.bf16.mxu0 0
    %157 = vmatpush1.bf16.msra.mxu0 0
    %158 = vmatprep.subr.bf16.mxu0 0
    %159 = vmatpush1.bf16.msra.mxu0 0
    %160 = vmatprep.subr.bf16.mxu0 0
    %161 = vmatpush1.bf16.msra.mxu0 0
    %162 = vmatprep.subr.bf16.mxu0 0
    %163 = vmatpush1.bf16.msra.mxu0 0
    %164 = vmatprep.subr.bf16.mxu0 0
    %165 = vmatpush1.bf16.msra.mxu0 0
    %166 = vmatprep.mubr.bf16.mxu0 0
    %167 = vmatmul.mubr.bf16.gmra.mrb[0].mxu0 %v132
    %v168 = vpop.f32.mrb[0].mxu0
    %v169 = vadd.f32 %v122, %v168
    %v170 = vpop.f32.mrb[0].mxu0
    %v171 = vpop.f32.mrb[0].mxu0
    %v172 = vpop.f32.mrb[0].mxu0
    %173 = vdwg.mxu0
    %v174 = vmax.f32 %v169, 0.0
    %v175 = vpack.c.bf16 %v174, %v174
    %v176 = vld [vmem:[%s3] sm:$0xf]
    %v177 = vld [vmem:[%s3 + $0x4] sm:$0xf]
    %v178 = vld [vmem:[%s3 + $0x8] sm:$0xf]
    %v179 = vld [vmem:[%s3 + $0xc] sm:$0xf]
    %v180 = vld [vmem:[%s3 + $0x10] sm:$0xf]
    %v181 = vld [vmem:[%s3 + $0x14] sm:$0xf]
    %v182 = vld [vmem:[%s3 + $0x18] sm:$0xf]
    %v183 = vld [vmem:[%s3 + $0x1c] sm:$0xf]
    %v184 = vld [vmem:[%s4] sm:$0x1]
    %v186 = vlaneseq
    %v187 = vshrl.u32 %v186, 7
    %v188 = vsub.s32 0, %v187
    %v189 = vrot.slane %v184, %v188
    %v199 = vunpack.c.l.b16 %v176
    %v200 = vunpack.c.l.b16 %v177
    %v201 = vunpack.c.l.b16 %v178
    %v202 = vunpack.c.l.b16 %v179
    %v203 = vunpack.c.l.b16 %v180
    %v204 = vunpack.c.l.b16 %v181
    %v205 = vunpack.c.l.b16 %v182
    %v206 = vunpack.c.l.b16 %v183
    %v207 = vpack.c.b16 %v200, %v199
    %v208 = vpack.c.b16 %v202, %v201
    %v209 = vpack.c.b16 %v204, %v203
    %v210 = vpack.c.b16 %v206, %v205
    %vm215 = vcmask 523264
    %v217 = vsel %vm215, %v175, 0
    %219 = vmatprep.subr.bf16.mxu0 0
    %220 = vmatpush1.bf16.msra.mxu0 %v207
    %221 = vmatprep.subr.bf16.mxu0 0
    %222 = vmatpush1.bf16.msra.mxu0 %v208
    %223 = vmatprep.subr.bf16.mxu0 0
    %224 = vmatpush1.bf16.msra.mxu0 %v209
    %225 = vmatprep.subr.bf16.mxu0 0
    %226 = vmatpush1.bf16.msra.mxu0 %v210
    %227 = vmatprep.subr.bf16.mxu0 0
    %228 = vmatpush1.bf16.msra.mxu0 0
    %229 = vmatprep.subr.bf16.mxu0 0
    %230 = vmatpush1.bf16.msra.mxu0 0
    %231 = vmatprep.subr.bf16.mxu0 0
    %232 = vmatpush1.bf16.msra.mxu0 0
    %233 = vmatprep.subr.bf16.mxu0 0
    %234 = vmatpush1.bf16.msra.mxu0 0
    %235 = vmatprep.subr.bf16.mxu0 0
    %236 = vmatpush1.bf16.msra.mxu0 0
    %237 = vmatprep.subr.bf16.mxu0 0
    %238 = vmatpush1.bf16.msra.mxu0 0
    %239 = vmatprep.subr.bf16.mxu0 0
    %240 = vmatpush1.bf16.msra.mxu0 0
    %241 = vmatprep.subr.bf16.mxu0 0
    %242 = vmatpush1.bf16.msra.mxu0 0
    %243 = vmatprep.subr.bf16.mxu0 0
    %244 = vmatpush1.bf16.msra.mxu0 0
    %245 = vmatprep.subr.bf16.mxu0 0
    %246 = vmatpush1.bf16.msra.mxu0 0
    %247 = vmatprep.subr.bf16.mxu0 0
    %248 = vmatpush1.bf16.msra.mxu0 0
    %249 = vmatprep.subr.bf16.mxu0 0
    %250 = vmatpush1.bf16.msra.mxu0 0
    %251 = vmatprep.mubr.bf16.mxu0 0
    %252 = vmatmul.mubr.bf16.gmra.mrb[0].mxu0 %v217
    %v253 = vpop.f32.mrb[0].mxu0
    %v254 = vadd.f32 %v189, %v253
    %v255 = vpop.f32.mrb[0].mxu0
    %v256 = vpop.f32.mrb[0].mxu0
    %v257 = vpop.f32.mrb[0].mxu0
    %258 = vdwg.mxu0
    %v259 = vmax.f32 %v254, 0.0
    %v260 = vpack.c.bf16 %v259, %v259
    %v261 = vld [vmem:[%s5] sm:$0xf]
    %v262 = vld [vmem:[%s5 + $0x4] sm:$0xf]
    %v263 = vld [vmem:[%s5 + $0x8] sm:$0xf]
    %v264 = vld [vmem:[%s5 + $0xc] sm:$0xf]
    %v265 = vld [vmem:[%s5 + $0x10] sm:$0xf]
    %v266 = vld [vmem:[%s5 + $0x14] sm:$0xf]
    %v267 = vld [vmem:[%s5 + $0x18] sm:$0xf]
    %v268 = vld [vmem:[%s5 + $0x1c] sm:$0xf]
    %v269 = vld [vmem:[%s5 + $0x20] sm:$0xf]
    %v270 = vld [vmem:[%s5 + $0x24] sm:$0xf]
    %v271 = vld [vmem:[%s5 + $0x28] sm:$0xf]
    %v272 = vld [vmem:[%s5 + $0x2c] sm:$0xf]
    %v273 = vld [vmem:[%s5 + $0x30] sm:$0xf]
    %v274 = vld [vmem:[%s5 + $0x34] sm:$0xf]
    %v275 = vld [vmem:[%s5 + $0x38] sm:$0xf]
    %v276 = vld [vmem:[%s5 + $0x3c] sm:$0xf]
    %v277 = vld [vmem:[#allocation6] sm:$0x1]
    %v279 = vlaneseq
    %v280 = vshrl.u32 %v279, 7
    %v281 = vsub.s32 0, %v280
    %v282 = vrot.slane %v277, %v281
    %v300 = vunpack.c.l.b16 %v261
    %v301 = vunpack.c.l.b16 %v262
    %v302 = vunpack.c.l.b16 %v263
    %v303 = vunpack.c.l.b16 %v264
    %v304 = vunpack.c.l.b16 %v265
    %v305 = vunpack.c.l.b16 %v266
    %v306 = vunpack.c.l.b16 %v267
    %v307 = vunpack.c.l.b16 %v268
    %v308 = vunpack.c.l.b16 %v269
    %v309 = vunpack.c.l.b16 %v270
    %v310 = vunpack.c.l.b16 %v271
    %v311 = vunpack.c.l.b16 %v272
    %v312 = vunpack.c.l.b16 %v273
    %v313 = vunpack.c.l.b16 %v274
    %v314 = vunpack.c.l.b16 %v275
    %v315 = vunpack.c.l.b16 %v276
    %v316 = vpack.c.b16 %v301, %v300
    %v317 = vpack.c.b16 %v303, %v302
    %v318 = vpack.c.b16 %v305, %v304
    %v319 = vpack.c.b16 %v307, %v306
    %v320 = vpack.c.b16 %v309, %v308
    %v321 = vpack.c.b16 %v311, %v310
    %v322 = vpack.c.b16 %v313, %v312
    %v323 = vpack.c.b16 %v315, %v314
    %332 = vmatprep.subr.bf16.mxu0 0
    %333 = vmatpush1.bf16.msra.mxu0 %v316
    %334 = vmatprep.subr.bf16.mxu0 0
    %335 = vmatpush1.bf16.msra.mxu0 %v317
    %336 = vmatprep.subr.bf16.mxu0 0
    %337 = vmatpush1.bf16.msra.mxu0 %v318
    %338 = vmatprep.subr.bf16.mxu0 0
    %339 = vmatpush1.bf16.msra.mxu0 %v319
    %340 = vmatprep.subr.bf16.mxu0 0
    %341 = vmatpush1.bf16.msra.mxu0 %v320
    %342 = vmatprep.subr.bf16.mxu0 0
    %343 = vmatpush1.bf16.msra.mxu0 %v321
    %344 = vmatprep.subr.bf16.mxu0 0
    %345 = vmatpush1.bf16.msra.mxu0 %v322
    %346 = vmatprep.subr.bf16.mxu0 0
    %347 = vmatpush1.bf16.msra.mxu0 %v323
    %348 = vmatprep.subr.bf16.mxu0 0
    %349 = vmatpush1.bf16.msra.mxu0 0
    %350 = vmatprep.subr.bf16.mxu0 0
    %351 = vmatpush1.bf16.msra.mxu0 0
    %352 = vmatprep.subr.bf16.mxu0 0
    %353 = vmatpush1.bf16.msra.mxu0 0
    %354 = vmatprep.subr.bf16.mxu0 0
    %355 = vmatpush1.bf16.msra.mxu0 0
    %356 = vmatprep.subr.bf16.mxu0 0
    %357 = vmatpush1.bf16.msra.mxu0 0
    %358 = vmatprep.subr.bf16.mxu0 0
    %359 = vmatpush1.bf16.msra.mxu0 0
    %360 = vmatprep.subr.bf16.mxu0 0
    %361 = vmatpush1.bf16.msra.mxu0 0
    %362 = vmatprep.subr.bf16.mxu0 0
    %363 = vmatpush1.bf16.msra.mxu0 0
    %364 = vmatprep.mubr.bf16.mxu0 0
    %365 = vmatmul.mubr.bf16.gmra.mrb[0].mxu0 %v260
    %v366 = vpop.f32.mrb[0].mxu0
    %v367 = vadd.f32 %v282, %v366
    %v368 = vpop.f32.mrb[0].mxu0
    %v369 = vpop.f32.mrb[0].mxu0
    %v370 = vpop.f32.mrb[0].mxu0
    %371 = vdwg.mxu0
    %v372 = vmax.f32 %v367, 0.0
    %v373 = vpack.c.bf16 %v372, %v372
    %v374 = vld [vmem:[%s7] sm:$0xf]
    %v375 = vld [vmem:[%s7 + $0x4] sm:$0xf]
    %v376 = vld [vmem:[%s7 + $0x8] sm:$0xf]
    %v377 = vld [vmem:[%s7 + $0xc] sm:$0xf]
    %v378 = vld [vmem:[%s7 + $0x10] sm:$0xf]
    %v379 = vld [vmem:[%s7 + $0x14] sm:$0xf]
    %v380 = vld [vmem:[%s7 + $0x18] sm:$0xf]
    %v381 = vld [vmem:[%s7 + $0x1c] sm:$0xf]
    %v382 = vld [vmem:[%s7 + $0x20] sm:$0xf]
    %v383 = vld [vmem:[%s7 + $0x24] sm:$0xf]
    %v384 = vld [vmem:[%s7 + $0x28] sm:$0xf]
    %v385 = vld [vmem:[%s7 + $0x2c] sm:$0xf]
    %v386 = vld [vmem:[%s7 + $0x30] sm:$0xf]
    %v387 = vld [vmem:[%s7 + $0x34] sm:$0xf]
    %v388 = vld [vmem:[%s7 + $0x38] sm:$0xf]
    %v389 = vld [vmem:[%s7 + $0x3c] sm:$0xf]
    %v390 = vld [vmem:[#allocation7] sm:$0x1]
    %v392 = vlaneseq
    %v393 = vshrl.u32 %v392, 7
    %v394 = vsub.s32 0, %v393
    %v395 = vrot.slane %v390, %v394
    %v413 = vunpack.c.l.b16 %v374
    %v414 = vunpack.c.l.b16 %v375
    %v415 = vunpack.c.l.b16 %v376
    %v416 = vunpack.c.l.b16 %v377
    %v417 = vunpack.c.l.b16 %v378
    %v418 = vunpack.c.l.b16 %v379
    %v419 = vunpack.c.l.b16 %v380
    %v420 = vunpack.c.l.b16 %v381
    %v421 = vunpack.c.l.b16 %v382
    %v422 = vunpack.c.l.b16 %v383
    %v423 = vunpack.c.l.b16 %v384
    %v424 = vunpack.c.l.b16 %v385
    %v425 = vunpack.c.l.b16 %v386
    %v426 = vunpack.c.l.b16 %v387
    %v427 = vunpack.c.l.b16 %v388
    %v428 = vunpack.c.l.b16 %v389
    %v429 = vpack.c.b16 %v414, %v413
    %v430 = vpack.c.b16 %v416, %v415
    %v431 = vpack.c.b16 %v418, %v417
    %v432 = vpack.c.b16 %v420, %v419
    %v433 = vpack.c.b16 %v422, %v421
    %v434 = vpack.c.b16 %v424, %v423
    %v435 = vpack.c.b16 %v426, %v425
    %v436 = vpack.c.b16 %v428, %v427
    %445 = vmatprep.subr.bf16.mxu0 0
    %446 = vmatpush1.bf16.msra.mxu0 %v429
    %447 = vmatprep.subr.bf16.mxu0 0
    %448 = vmatpush1.bf16.msra.mxu0 %v430
    %449 = vmatprep.subr.bf16.mxu0 0
    %450 = vmatpush1.bf16.msra.mxu0 %v431
    %451 = vmatprep.subr.bf16.mxu0 0
    %452 = vmatpush1.bf16.msra.mxu0 %v432
    %453 = vmatprep.subr.bf16.mxu0 0
    %454 = vmatpush1.bf16.msra.mxu0 %v433
    %455 = vmatprep.subr.bf16.mxu0 0
    %456 = vmatpush1.bf16.msra.mxu0 %v434
    %457 = vmatprep.subr.bf16.mxu0 0
    %458 = vmatpush1.bf16.msra.mxu0 %v435
    %459 = vmatprep.subr.bf16.mxu0 0
    %460 = vmatpush1.bf16.msra.mxu0 %v436
    %461 = vmatprep.subr.bf16.mxu0 0
    %462 = vmatpush1.bf16.msra.mxu0 0
    %463 = vmatprep.subr.bf16.mxu0 0
    %464 = vmatpush1.bf16.msra.mxu0 0
    %465 = vmatprep.subr.bf16.mxu0 0
    %466 = vmatpush1.bf16.msra.mxu0 0
    %467 = vmatprep.subr.bf16.mxu0 0
    %468 = vmatpush1.bf16.msra.mxu0 0
    %469 = vmatprep.subr.bf16.mxu0 0
    %470 = vmatpush1.bf16.msra.mxu0 0
    %471 = vmatprep.subr.bf16.mxu0 0
    %472 = vmatpush1.bf16.msra.mxu0 0
    %473 = vmatprep.subr.bf16.mxu0 0
    %474 = vmatpush1.bf16.msra.mxu0 0
    %475 = vmatprep.subr.bf16.mxu0 0
    %476 = vmatpush1.bf16.msra.mxu0 0
    %477 = vmatprep.mubr.bf16.mxu0 0
    %478 = vmatmul.mubr.bf16.gmra.mrb[0].mxu0 %v373
    %v479 = vpop.f32.mrb[0].mxu0
    %v480 = vadd.f32 %v395, %v479
    %v481 = vpop.f32.mrb[0].mxu0
    %v482 = vpop.f32.mrb[0].mxu0
    %v483 = vpop.f32.mrb[0].mxu0
    %484 = vdwg.mxu0
    %v485 = vmax.f32 %v480, 0.0
    %v486 = vpack.c.bf16 %v485, %v485
    %v487 = vld [vmem:[#allocation9] sm:$0xf]
    %v488 = vld [vmem:[#allocation9 + $0x4] sm:$0xf]
    %v489 = vld [vmem:[#allocation9 + $0x8] sm:$0xf]
    %v490 = vld [vmem:[#allocation9 + $0xc] sm:$0xf]
    %v491 = vld [vmem:[#allocation9 + $0x10] sm:$0xf]
    %v492 = vld [vmem:[#allocation9 + $0x14] sm:$0xf]
    %v493 = vld [vmem:[#allocation9 + $0x18] sm:$0xf]
    %v494 = vld [vmem:[#allocation9 + $0x1c] sm:$0xf]
    %v503 = vunpack.c.l.b16 %v487
    %v504 = vunpack.c.l.b16 %v488
    %v505 = vunpack.c.l.b16 %v489
    %v506 = vunpack.c.l.b16 %v490
    %v507 = vunpack.c.l.b16 %v491
    %v508 = vunpack.c.l.b16 %v492
    %v509 = vunpack.c.l.b16 %v493
    %v510 = vunpack.c.l.b16 %v494
    %v511 = vpack.c.b16 %v504, %v503
    %v512 = vpack.c.b16 %v506, %v505
    %v513 = vpack.c.b16 %v508, %v507
    %v514 = vpack.c.b16 %v510, %v509
    %v520 = vsel %vm215, %v486, 0
    %522 = vmatprep.subr.bf16.mxu0 0
    %523 = vmatpush1.bf16.msra.mxu0 %v511
    %524 = vmatprep.subr.bf16.mxu0 0
    %525 = vmatpush1.bf16.msra.mxu0 %v512
    %526 = vmatprep.subr.bf16.mxu0 0
    %527 = vmatpush1.bf16.msra.mxu0 %v513
    %528 = vmatprep.subr.bf16.mxu0 0
    %529 = vmatpush1.bf16.msra.mxu0 %v514
    %530 = vmatprep.subr.bf16.mxu0 0
    %531 = vmatpush1.bf16.msra.mxu0 0
    %532 = vmatprep.subr.bf16.mxu0 0
    %533 = vmatpush1.bf16.msra.mxu0 0
    %534 = vmatprep.subr.bf16.mxu0 0
    %535 = vmatpush1.bf16.msra.mxu0 0
    %536 = vmatprep.subr.bf16.mxu0 0
    %537 = vmatpush1.bf16.msra.mxu0 0
    %538 = vmatprep.subr.bf16.mxu0 0
    %539 = vmatpush1.bf16.msra.mxu0 0
    %540 = vmatprep.subr.bf16.mxu0 0
    %541 = vmatpush1.bf16.msra.mxu0 0
    %542 = vmatprep.subr.bf16.mxu0 0
    %543 = vmatpush1.bf16.msra.mxu0 0
    %544 = vmatprep.subr.bf16.mxu0 0
    %545 = vmatpush1.bf16.msra.mxu0 0
    %546 = vmatprep.subr.bf16.mxu0 0
    %547 = vmatpush1.bf16.msra.mxu0 0
    %548 = vmatprep.subr.bf16.mxu0 0
    %549 = vmatpush1.bf16.msra.mxu0 0
    %550 = vmatprep.subr.bf16.mxu0 0
    %551 = vmatpush1.bf16.msra.mxu0 0
    %552 = vmatprep.subr.bf16.mxu0 0
    %553 = vmatpush1.bf16.msra.mxu0 0
    %554 = vmatprep.mubr.bf16.mxu0 0
    %555 = vmatmul.mubr.bf16.gmra.mrb[0].mxu0 %v520
    %v556 = vpop.f32.mrb[0].mxu0
    %v557 = vadd.f32 0.0, %v556
    %v558 = vpop.f32.mrb[0].mxu0
    %v559 = vpop.f32.mrb[0].mxu0
    %v560 = vpop.f32.mrb[0].mxu0
    %561 = vdwg.mxu0
    %v562 = vld [vmem:[#allocation10] sm:$0x1]
    %v564 = vlaneseq
    %v565 = vshrl.u32 %v564, 7
    %v566 = vsub.s32 0, %v565
    %v567 = vrot.slane %v562, %v566
    %v569 = vadd.f32 %v557, %v567
    %v570 = vtanh.pop %v569
    %v571 = vpack.c.bf16 %v570, %v570
    %vm572 = vcmask 27648
    %573 = vst.msk [vmem:[%s11] sm:$0xf] %vm572, %v571
    // Predicated region
    $region70: #{continuous_policy_forward.1} parent=1 // pred_check
      _
    $region71: #{continuous_policy_forward.1} parent=1 // pred_check_branch
      %575 = sbr.rel (0) target = $region73
    $region72: #{continuous_policy_forward.1} parent=1 // pred_region
      _
    $region73: #{continuous_policy_forward.1} parent=1 // pred_fallthru
      _
    // Predicated region
    $region74: #{continuous_policy_forward.1} parent=1 // pred_check
      _
    $region75: #{continuous_policy_forward.1} parent=1 // pred_check_branch
      %577 = sbr.rel (0) target = $region77
    $region76: #{continuous_policy_forward.1} parent=1 // pred_region
      _
    $region77: #{continuous_policy_forward.1} parent=1 // pred_fallthru
      _
    %578 = vsyncpa [#allocation3], 1
    %579 = vsyncpa [#allocation5], 1
    %580 = vsyncpa [#allocation8], 1
    %581 = vsyncpa [#allocation11], 1

</llo_original>
